<compile_context>
chip_gen: v7x
topology: tpu7x:2x2x1
jax: 0.10.0
libtpu: 0.0.40
codegen_flags: <defaults>
</compile_context>

<pallas_src>
import functools

import jax
import jax.numpy as jnp
from jax.experimental import pallas as pl
from jax.experimental.pallas import tpu as pltpu

_MAX_TN = 2048   # lane-tile cap (multiple of 128)
_SB = 32         # sublane fold for the scale==1 path (int8 native tile (32,128))


# ----------------------------------------------------------------------------
# Pallas kernel: 5-term weighted corner sum (weights / corners precomputed).
#   w_ref : (5, WS, TN) f32  simplex weights (WS==1 broadcasts over S rows on
#           the final-stage path, WS==SB on the folded intermediate path)
#   pk_ref: (S_or_SB, TN) int8 gathered LUT corners (exact int8 LUT values)
#   o_ref : (S_or_SB, TN) f32
# ----------------------------------------------------------------------------
def _interp5_kernel(w_ref, p0_ref, p1_ref, p2_ref, p3_ref, p4_ref, o_ref):
    # accumulate-as-you-go: at most one upcast corner + the accumulator live.
    acc = w_ref[0] * p0_ref[...].astype(jnp.float32)
    acc = acc + w_ref[1] * p1_ref[...].astype(jnp.float32)
    acc = acc + w_ref[2] * p2_ref[...].astype(jnp.float32)
    acc = acc + w_ref[3] * p3_ref[...].astype(jnp.float32)
    acc = acc + w_ref[4] * p4_ref[...].astype(jnp.float32)
    o_ref[...] = acc


# ----------------------------------------------------------------------------
# Tiling plan + pallas_call wrapper.
# ----------------------------------------------------------------------------
def _round_up(x, m):
    return ((x + m - 1) // m) * m


@functools.lru_cache(maxsize=None)
def _min_grid_steps():
    # v7x has 2 TensorCores sharing the ("parallel",) grid axis: keep >= 4 grid
    # steps there (>= 2 per core so each core's input double-buffer overlaps).
    # v5e / v6e are single-core -> no clamp; the biggest tile wins.
    try:
        kind = getattr(jax.devices()[0], "device_kind", "") or ""
    except Exception:
        kind = ""
    return 4 if "v7" in kind.lower() else 1


def _pick_tn(cols):
    """Lane tile width: multiple of 128, as large as possible (per-step
    overhead ~0.35us dominates at these HBM bandwidths), clamped only on
    multi-core chips so both cores get work."""
    cols = max(int(cols), 1)
    tn = min(_MAX_TN, _round_up(cols, 128))
    steps = _min_grid_steps()
    if steps > 1 and cols > steps * 128:
        tn = min(tn, _round_up(pl.cdiv(cols, steps), 128))
    return max(tn, 128)


def _tile_plan(s, n):
    """Returns (sublane_fold, lane_tile, padded_pixel_count)."""
    if s == 1:
        sb = _SB
        tn = _pick_tn(pl.cdiv(n, sb))
        return sb, tn, _round_up(n, sb * tn)
    tn = _pick_tn(n)
    return None, tn, _round_up(n, tn)


def _run_interp_pallas(w, corners, sb, tn):
    """w: (5, n_pad) f32; corners: list of 5 (S, n_pad) int8.
    Returns (S, n_pad) f32."""
    s, n_pad = corners[0].shape
    cp = pltpu.CompilerParams(dimension_semantics=("parallel",))

    if s == 1:
        # fold pixels onto the sublane axis in 32-row (int8-native) blocks so
        # every vreg / VPU op is fully utilized on the intermediate stages.
        rows = n_pad // tn
        wr = w.reshape(5, rows, tn)
        prs = [c.reshape(rows, tn) for c in corners]
        out = pl.pallas_call(
            _interp5_kernel,
            out_shape=jax.ShapeDtypeStruct((rows, tn), jnp.float32),
            grid=(rows // sb,),
            in_specs=[pl.BlockSpec((5, sb, tn), lambda i: (0, i, 0))]
                     + [pl.BlockSpec((sb, tn), lambda i: (i, 0))] * 5,
            out_specs=pl.BlockSpec((sb, tn), lambda i: (i, 0)),
            compiler_params=cp,
        )(wr, *prs)
        return out.reshape(1, n_pad)

    wr = w.reshape(5, 1, n_pad)
    return pl.pallas_call(
        _interp5_kernel,
        out_shape=jax.ShapeDtypeStruct((s, n_pad), jnp.float32),
        grid=(n_pad // tn,),
        in_specs=[pl.BlockSpec((5, 1, tn), lambda i: (0, 0, i))]
                 + [pl.BlockSpec((s, tn), lambda i: (0, i))] * 5,
        out_specs=pl.BlockSpec((s, tn), lambda i: (0, i)),
        compiler_params=cp,
    )(wr, *corners)


# ----------------------------------------------------------------------------
# XLA-side per-pixel precompute: sorted-order weights + 5 corner codes.
# ----------------------------------------------------------------------------
def _cswap(v_hi, t_hi, v_lo, t_lo):
    # keep the larger value (and its corner-bit tag) in the first slot; ties
    # keep the a,b,c,d order (tied terms get zero weight, so the result matches
    # the reference's strict-'>' branch cascade exactly).
    sw = v_lo > v_hi
    return (jnp.where(sw, v_lo, v_hi), jnp.where(sw, t_lo, t_hi),
            jnp.where(sw, v_hi, v_lo), jnp.where(sw, t_hi, t_lo))


def _tetra_weights_codes(fa, fb, fc, fd, q):
    """Sort the 4 fractions (descending), carrying corner-bit tags
    (a=8, b=4, c=2, d=1).  Returns the 5 simplex weights (5, N) f32 and the
    5 corner codes (list of (N,) int32; bit 3/2/1/0 = +1 on axis a/b/c/d)."""
    shp = fa.shape
    zero = jnp.zeros(shp, jnp.int32)
    t_a = jnp.full(shp, 8, jnp.int32)
    t_b = jnp.full(shp, 4, jnp.int32)
    t_c = jnp.full(shp, 2, jnp.int32)
    t_d = jnp.full(shp, 1, jnp.int32)

    # optimal 5-comparator sorting network for 4 elements (descending)
    v0, t0, v1, t1 = _cswap(fa, t_a, fb, t_b)
    v2, t2, v3, t3 = _cswap(fc, t_c, fd, t_d)
    v0, t0, v2, t2 = _cswap(v0, t0, v2, t2)
    v1, t1, v3, t3 = _cswap(v1, t1, v3, t3)
    v1, t1, v2, t2 = _cswap(v1, t1, v2, t2)
    # now v0 >= v1 >= v2 >= v3

    weights = jnp.stack([q - v0, v0 - v1, v1 - v2, v2 - v3, v3]).astype(jnp.float32)
    codes = [zero, t0, t0 + t1, 15 - t3, jnp.full(shp, 15, jnp.int32)]
    return weights, codes


def tetra_interp_lut(lut_t, a1, b1, c1, d1, fa, fb, fc, fd, q, L):
    """lut_t: (S, L**4) int8 quantized LUT (pre-transposed, lane-dense gathers).
    a1..d1: (N,) int32 base indices; fa..fd: (N,) f32 fractionals.
    Returns (S, N) f32 (caller divides by q)."""
    n = a1.shape[0]
    s = lut_t.shape[0]
    sb, tn, n_pad = _tile_plan(s, n)
    pad = n_pad - n

    # Clamp base indices so the +1 corners stay in range even if samplers ever
    # go un-normalized (defensive; identical behaviour for in-range values).
    a1, b1, c1, d1 = [jnp.clip(v, 0, L - 2) for v in (a1, b1, c1, d1)]

    # Pad the small per-pixel arrays BEFORE the gather so the big corner stream
    # never takes an extra HBM padding pass.
    a1, b1, c1, d1 = [jnp.pad(v, (0, pad)) for v in (a1, b1, c1, d1)]
    fa, fb, fc, fd = [jnp.pad(v.astype(jnp.float32), (0, pad))
                      for v in (fa, fb, fc, fd)]

    # Per-pixel precompute in XLA: 5 simplex weights + the 5 corner codes of
    # the containing tetrahedron -> only 5 of 16 corners are gathered.
    weights, codes = _tetra_weights_codes(fa, fb, fc, fd, float(q))

    # 5 per-corner gathers straight into the kernel's (S, n_pad) int8 layout
    # (separate arrays -> no jnp.stack copy of the largest array).
    # TODO(synk): fusing the gather into the kernel (LUT resident in VMEM,
    # ~1.3 MiB int8) would remove the HBM intermediate entirely; TPU in-kernel
    # gathers are per-element so it stays an XLA gather for now.
    corners = []
    for code in codes:
        idx = ((((a1 + ((code >> 3) & 1)) * L + (b1 + ((code >> 2) & 1))) * L
                + (c1 + ((code >> 1) & 1))) * L + (d1 + (code & 1)))
        corners.append(jnp.take(lut_t, idx, axis=1, mode="clip"))  # (S, n_pad) i8

    out = _run_interp_pallas(weights, corners, sb, tn)
    return out[:, :n]


# ----------------------------------------------------------------------------
# Plain-JAX glue reproducing AutoLUT forward semantics.
# ----------------------------------------------------------------------------
def auto_sample(img, sw):
    """img: (B, C, Hp, Wp), sw: (4, 1, K, K) -> a, b, c, d each (B, C, h, w)."""
    B, C, Hp, Wp = img.shape
    K = sw.shape[-1]
    x = img.reshape(B * C, 1, Hp, Wp)
    # TODO(synk): the KxK sampling conv (4 taps) stays in XLA; the Pallas kernel
    # covers the dominant tetrahedral-interpolation path.
    y = jax.lax.conv_general_dilated(
        x, sw, window_strides=(1, 1), padding="VALID",
        dimension_numbers=("NCHW", "OIHW", "NCHW"))
    h, w = Hp - K + 1, Wp - K + 1
    y = y.reshape(B, C, 4, h, w)
    return y[:, :, 0], y[:, :, 1], y[:, :, 2], y[:, :, 3]


def interp_torch_batch(lut_t, res_w, sampler_w, upscale, img_in, prev_img, bd, interval):
    B, C, Hp, Wp = img_in.shape
    h, w = Hp - bd, Wp - bd
    q = 2 ** interval
    L = 2 ** (8 - interval) + 1

    a, b, c, d = auto_sample(img_in, sampler_w)
    if prev_img is not None:
        rw = jnp.clip(res_w, 0.0, 1.0)
        pa, pb, pc, pd = auto_sample(prev_img, sampler_w)
        a = rw[0, 0] * pa + (1.0 - rw[0, 0]) * a
        b = rw[0, 1] * pb + (1.0 - rw[0, 1]) * b
        c = rw[1, 0] * pc + (1.0 - rw[1, 0]) * c
        d = rw[1, 1] * pd + (1.0 - rw[1, 1]) * d

    a1 = jnp.floor(a / q).astype(jnp.int32)
    b1 = jnp.floor(b / q).astype(jnp.int32)
    c1 = jnp.floor(c / q).astype(jnp.int32)
    d1 = jnp.floor(d / q).astype(jnp.int32)
    fa, fb, fc, fd = a % q, b % q, c % q, d % q

    out = tetra_interp_lut(
        lut_t,
        a1.reshape(-1), b1.reshape(-1), c1.reshape(-1), d1.reshape(-1),
        fa.reshape(-1), fb.reshape(-1), fc.reshape(-1), fd.reshape(-1),
        q, L)                                                  # (S, N)
    # (up, up, B, C, h, w) -> (B, C, h, up, w, up) -> (B, C, h*up, w*up)
    out = out.reshape(upscale, upscale, B, C, h, w)
    out = out.transpose(2, 3, 4, 0, 5, 1).reshape(B, C, h * upscale, w * upscale)
    return out / q


def _pad_br(x, pad):
    return jnp.pad(x, ((0, 0), (0, 0), (0, pad), (0, pad)), mode="edge")


def rotate_input(lut_t, scale, sampler_w, x, pad, res_w, prev_x, interval):
    pred = 0.0
    for r in range(4):
        xr = _pad_br(jnp.rot90(x, k=r, axes=(2, 3)), pad)
        pxr = _pad_br(jnp.rot90(prev_x, k=r, axes=(2, 3)), pad) if prev_x is not None else None
        o = interp_torch_batch(lut_t, res_w, sampler_w, scale, xr, pxr, pad, interval)
        pred = pred + jnp.rot90(o, k=(4 - r) % 4, axes=(2, 3))
        # PyTorch: pred += rot; pred = round_func(pred)  (round the running sum
        # after each rotation -> matches round_func forward-value placement).
        pred = jnp.round(pred)
    return pred


def autolut_forward(x, params, *, stages, samplers, sample_size, upscale, interval,
                    phase="train"):
    x = x * 255.0
    prev_x = None
    for stage in range(stages):
        pred = 0.0
        if stage == stages - 1:
            avg_factor, bias = float(samplers), 0.0
            scale = upscale
        else:
            avg_factor, bias = float(samplers * 4), 127.0
            scale = 1
        for m in range(samplers):
            pad = sample_size - 1
            key = f"s{stage}_{m}"
            weight = params["weight_" + key]
            # fix_weight, hoisted out of the rotation loop, pre-transposed to
            # (S, L^4) for lane-dense gathers, stored as int8 (exact for the
            # int8-quantized LUT) to halve the corner HBM stream vs. bf16.
            wq_t = jnp.clip(jnp.round(weight * 127.0), -127.0, 127.0).astype(jnp.int8).T
            sw = params[key + "_sampler"]
            rw = params.get(key + "_residual", None)
            pred = pred + rotate_input(wq_t, scale, sw, x, pad, rw, prev_x, interval)
        prev_x = x
        x = jnp.round(jnp.clip(pred / avg_factor + bias, 0.0, 255.0))
    if phase == "train":
        x = x / 255.0
    return x


# ----------------------------------------------------------------------------
# 24-branch reference (literal transcription of the PyTorch spec) — used only
# for an in-script correctness check of the 5-corner precompute + Pallas path.
# ----------------------------------------------------------------------------
def _tetra_reference(fa, fb, fc, fd, p, q):
    """fa..fd: (N,); p: (16, S, N) f32.  Returns (S, N) f32."""
    fa = fa[None, :]; fb = fb[None, :]; fc = fc[None, :]; fd = fd[None, :]
    (p0000, p0001, p0010, p0011, p0100, p0101, p0110, p0111,
     p1000, p1001, p1010, p1011, p1100, p1101, p1110, p1111) = [p[k] for k in range(16)]
    fab = fa > fb; fac = fa > fc; fad = fa > fd
    fbc = fb > fc; fbd = fb > fd; fcd = fc > fd
    out = jnp.zeros_like(p0000)

    i1 = fab & fbc & fcd
    out = jnp.where(i1, (q - fa) * p0000 + (fa - fb) * p1000 + (fb - fc) * p1100 + (fc - fd) * p1110 + fd * p1111, out)
    i2 = (~i1) & fab & fbc & fbd
    out = jnp.where(i2, (q - fa) * p0000 + (fa - fb) * p1000 + (fb - fd) * p1100 + (fd - fc) * p1101 + fc * p1111, out)
    i3 = (~i1) & (~i2) & fab & fbc & fad
    out = jnp.where(i3, (q - fa) * p0000 + (fa - fd) * p1000 + (fd - fb) * p1001 + (fb - fc) * p1101 + fc * p1111, out)
    i4 = (~i1) & (~i2) & (~i3) & fab & fbc
    out = jnp.where(i4, (q - fd) * p0000 + (fd - fa) * p0001 + (fa - fb) * p1001 + (fb - fc) * p1101 + fc * p1111, out)
    i5 = (~fbc) & fab & fac & fbd
    out = jnp.where(i5, (q - fa) * p0000 + (fa - fc) * p1000 + (fc - fb) * p1010 + (fb - fd) * p1110 + fd * p1111, out)
    i6 = (~fbc) & (~i5) & fab & fac & fcd
    out = jnp.where(i6, (q - fa) * p0000 + (fa - fc) * p1000 + (fc - fd) * p1010 + (fd - fb) * p1011 + fb * p1111, out)
    i7 = (~fbc) & (~i5) & (~i6) & fab & fac & fad
    out = jnp.where(i7, (q - fa) * p0000 + (fa - fd) * p1000 + (fd - fc) * p1001 + (fc - fb) * p1011 + fb * p1111, out)
    i8 = (~fbc) & (~i5) & (~i6) & (~i7) & fab & fac
    out = jnp.where(i8, (q - fd) * p0000 + (fd - fa) * p0001 + (fa - fc) * p1001 + (fc - fb) * p1011 + fb * p1111, out)
    i9 = (~fbc) & (~fac) & fab & fbd
    out = jnp.where(i9, (q - fc) * p0000 + (fc - fa) * p0010 + (fa - fb) * p1010 + (fb - fd) * p1110 + fd * p1111, out)
    i10 = (~fbc) & (~fac) & (~i9) & fab & fad
    out = jnp.where(i10, (q - fc) * p0000 + (fc - fa) * p0010 + (fa - fd) * p1010 + (fd - fb) * p1011 + fb * p1111, out)
    i11 = (~fbc) & (~fac) & (~i9) & (~i10) & fab & fcd
    out = jnp.where(i11, (q - fc) * p0000 + (fc - fd) * p0010 + (fd - fa) * p0011 + (fa - fb) * p1011 + fb * p1111, out)
    i12 = (~fbc) & (~fac) & (~i9) & (~i10) & (~i11) & fab
    out = jnp.where(i12, (q - fd) * p0000 + (fd - fc) * p0001 + (fc - fa) * p0011 + (fa - fb) * p1011 + fb * p1111, out)
    i13 = (~fab) & fac & fcd
    out = jnp.where(i13, (q - fb) * p0000 + (fb - fa) * p0100 + (fa - fc) * p1100 + (fc - fd) * p1110 + fd * p1111, out)
    i14 = (~fab) & (~i13) & fac & fad
    out = jnp.where(i14, (q - fb) * p0000 + (fb - fa) * p0100 + (fa - fd) * p1100 + (fd - fc) * p1101 + fc * p1111, out)
    i15 = (~fab) & (~i13) & (~i14) & fac & fbd
    out = jnp.where(i15, (q - fb) * p0000 + (fb - fd) * p0100 + (fd - fa) * p0101 + (fa - fc) * p1101 + fc * p1111, out)
    i16 = (~fab) & (~i13) & (~i14) & (~i15) & fac
    out = jnp.where(i16, (q - fd) * p0000 + (fd - fb) * p0001 + (fb - fa) * p0101 + (fa - fc) * p1101 + fc * p1111, out)
    i17 = (~fab) & (~fac) & fbc & fad
    out = jnp.where(i17, (q - fb) * p0000 + (fb - fc) * p0100 + (fc - fa) * p0110 + (fa - fd) * p1110 + fd * p1111, out)
    i18 = (~fab) & (~fac) & (~i17) & fbc & fcd
    out = jnp.where(i18, (q - fb) * p0000 + (fb - fc) * p0100 + (fc - fd) * p0110 + (fd - fa) * p0111 + fa * p1111, out)
    i19 = (~fab) & (~fac) & (~i17) & (~i18) & fbc & fbd
    out = jnp.where(i19, (q - fb) * p0000 + (fb - fd) * p0100 + (fd - fc) * p0101 + (fc - fa) * p0111 + fa * p1111, out)
    i20 = (~fab) & (~fac) & (~i17) & (~i18) & (~i19) & fbc
    out = jnp.where(i20, (q - fd) * p0000 + (fd - fb) * p0001 + (fb - fc) * p0101 + (fc - fa) * p0111 + fa * p1111, out)
    i21 = (~fab) & (~fac) & (~fbc) & fad
    out = jnp.where(i21, (q - fc) * p0000 + (fc - fb) * p0010 + (fb - fa) * p0110 + (fa - fd) * p1110 + fd * p1111, out)
    i22 = (~fab) & (~fac) & (~fbc) & (~i21) & fbd
    out = jnp.where(i22, (q - fc) * p0000 + (fc - fb) * p0010 + (fb - fd) * p0110 + (fd - fa) * p0111 + fa * p1111, out)
    i23 = (~fab) & (~fac) & (~fbc) & (~i21) & (~i22) & fcd
    out = jnp.where(i23, (q - fc) * p0000 + (fc - fd) * p0010 + (fd - fb) * p0011 + (fb - fa) * p0111 + fa * p1111, out)
    i24 = (~fab) & (~fac) & (~fbc) & (~i21) & (~i22) & (~i23)
    out = jnp.where(i24, (q - fd) * p0000 + (fd - fc) * p0001 + (fc - fb) * p0011 + (fb - fa) * p0111 + fa * p1111, out)
    return out


# ----------------------------------------------------------------------------
# Deterministic parameter construction (synthetic, matching __init__ shapes).
# ----------------------------------------------------------------------------
def init_params(key, *, stages, samplers, sample_size, upscale, interval):
    L = 2 ** (8 - interval) + 1
    params = {}
    for stage in range(stages):
        scale = upscale if stage == stages - 1 else 1
        for m in range(samplers):
            key, k1, k2, k3 = jax.random.split(key, 4)
            name = f"s{stage}_{m}"
            lut = jax.random.randint(k1, (L ** 4, scale * scale), -127, 128,
                                     dtype=jnp.int32).astype(jnp.float32) / 127.0
            params["weight_" + name] = lut
            # sampler conv (4, 1, K, K): nonneg, each filter sums to 1 so sampled
            # values stay inside [0, 255] (valid LUT index range).
            sw = jax.random.uniform(k2, (4, 1, sample_size, sample_size),
                                    minval=0.05, maxval=1.0, dtype=jnp.float32)
            sw = sw / jnp.sum(sw, axis=(2, 3), keepdims=True)
            params[name + "_sampler"] = sw
            if stage > 0:
                params[name + "_residual"] = jax.random.uniform(
                    k3, (2, 2), minval=0.0, maxval=1.0, dtype=jnp.float32)
    return params


if __name__ == "__main__":
    STAGES, SAMPLERS, SAMPLE_SIZE, UPSCALE, INTERVAL = 2, 2, 2, 4, 4
    B, C, H, W = 2, 3, 8, 8

    root = jax.random.PRNGKey(0)
    k1, k2, kx, kp = jax.random.split(root, 4)

    # --- direct check: 5-corner precompute + gather + Pallas kernel vs. the
    #     24-branch reference.  Corners are exact int8 -> tolerance is f32
    #     rounding at |out| <= q*127, i.e. ~1e-3.
    n_t, s_t = 300, UPSCALE * UPSCALE
    q_t = float(2 ** INTERVAL)
    L_t = 2 ** (8 - INTERVAL) + 1
    lut_int = jax.random.randint(k1, (s_t, L_t ** 4), -127, 128, dtype=jnp.int32)
    vals = jax.random.uniform(k2, (4, n_t), minval=0.0, maxval=255.0,
                              dtype=jnp.float32)
    base = jnp.floor(vals / q_t).astype(jnp.int32)
    frac = vals % q_t

    got = tetra_interp_lut(lut_int.astype(jnp.int8),
                           base[0], base[1], base[2], base[3],
                           frac[0], frac[1], frac[2], frac[3], q_t, L_t)
    got = jax.block_until_ready(got)

    lut_f = lut_int.astype(jnp.float32)
    p_all = []
    for A in (0, 1):
        for B_ in (0, 1):
            for C_ in (0, 1):
                for D_ in (0, 1):
                    idx = ((((base[0] + A) * L_t + (base[1] + B_)) * L_t
                            + (base[2] + C_)) * L_t + (base[3] + D_))
                    p_all.append(jnp.take(lut_f, idx, axis=1))
    p_all = jnp.stack(p_all, axis=0)                               # (16, S, N)
    want = _tetra_reference(frac[0], frac[1], frac[2], frac[3], p_all, q_t)
    max_err = float(jnp.max(jnp.abs(got - want)))
    assert jnp.allclose(got, want, atol=2e-3, rtol=1e-6), max_err

    # --- full AutoLUT forward -------------------------------------------------
    x = jax.random.uniform(kx, (B, C, H, W), dtype=jnp.float32)      # in [0, 1)
    params = init_params(kp, stages=STAGES, samplers=SAMPLERS,
                         sample_size=SAMPLE_SIZE, upscale=UPSCALE, interval=INTERVAL)

    fwd = jax.jit(functools.partial(
        autolut_forward, stages=STAGES, samplers=SAMPLERS,
        sample_size=SAMPLE_SIZE, upscale=UPSCALE, interval=INTERVAL, phase="train"))

    y = jax.block_until_ready(fwd(x, params))

    assert y.shape == (B, C, H * UPSCALE, W * UPSCALE), y.shape
    assert bool(jnp.all(jnp.isfinite(y)))
    print("KERNEL_OK")
</pallas_src>

<mosaic_0001>
module attributes {stable_mosaic.version = 11 : i64} {
  func.func @_interp5_kernel(%arg0: i32, %arg1: memref<5x1x384xf32, #tpu.memory_space<vmem>>, %arg2: memref<16x384xi8, #tpu.memory_space<vmem>>, %arg3: memref<16x384xi8, #tpu.memory_space<vmem>>, %arg4: memref<16x384xi8, #tpu.memory_space<vmem>>, %arg5: memref<16x384xi8, #tpu.memory_space<vmem>>, %arg6: memref<16x384xi8, #tpu.memory_space<vmem>>, %arg7: memref<16x384xf32, #tpu.memory_space<vmem>>) attributes {dimension_semantics = [#tpu.dimension_semantics<parallel>], iteration_bounds = array<i64: 1>, scalar_prefetch = 0 : i64, scratch_operands = 0 : i64, tpu.core_type = #tpu.core_type<tc>, window_params = [{transform_indices = @transform_0, window_bounds = array<i64: 5, 1, 384>}, {transform_indices = @transform_1, window_bounds = array<i64: 16, 384>}, {transform_indices = @transform_2, window_bounds = array<i64: 16, 384>}, {transform_indices = @transform_3, window_bounds = array<i64: 16, 384>}, {transform_indices = @transform_4, window_bounds = array<i64: 16, 384>}, {transform_indices = @transform_5, window_bounds = array<i64: 16, 384>}, {transform_indices = @transform_6, window_bounds = array<i64: 16, 384>}]} {
    %c0 = arith.constant 0 : index
    %c0_0 = arith.constant 0 : index
    %c0_1 = arith.constant 0 : index
    %0 = vector.load %arg1[%c0, %c0_0, %c0_1] : memref<5x1x384xf32, #tpu.memory_space<vmem>>, vector<1x1x384xf32>
    %1 = vector.shape_cast %0 : vector<1x1x384xf32> to vector<1x384xf32>
    %c0_2 = arith.constant 0 : index
    %c0_3 = arith.constant 0 : index
    %2 = vector.load %arg2[%c0_2, %c0_3] : memref<16x384xi8, #tpu.memory_space<vmem>>, vector<16x384xi8>
    %3 = arith.sitofp %2 : vector<16x384xi8> to vector<16x384xf32>
    %4 = vector.broadcast %1 : vector<1x384xf32> to vector<16x384xf32>
    %5 = arith.mulf %4, %3 : vector<16x384xf32>
    %c1 = arith.constant 1 : index
    %c0_4 = arith.constant 0 : index
    %c0_5 = arith.constant 0 : index
    %6 = vector.load %arg1[%c1, %c0_4, %c0_5] : memref<5x1x384xf32, #tpu.memory_space<vmem>>, vector<1x1x384xf32>
    %7 = vector.shape_cast %6 : vector<1x1x384xf32> to vector<1x384xf32>
    %c0_6 = arith.constant 0 : index
    %c0_7 = arith.constant 0 : index
    %8 = vector.load %arg3[%c0_6, %c0_7] : memref<16x384xi8, #tpu.memory_space<vmem>>, vector<16x384xi8>
    %9 = arith.sitofp %8 : vector<16x384xi8> to vector<16x384xf32>
    %10 = vector.broadcast %7 : vector<1x384xf32> to vector<16x384xf32>
    %11 = arith.mulf %10, %9 : vector<16x384xf32>
    %12 = arith.addf %5, %11 : vector<16x384xf32>
    %c2 = arith.constant 2 : index
    %c0_8 = arith.constant 0 : index
    %c0_9 = arith.constant 0 : index
    %13 = vector.load %arg1[%c2, %c0_8, %c0_9] : memref<5x1x384xf32, #tpu.memory_space<vmem>>, vector<1x1x384xf32>
    %14 = vector.shape_cast %13 : vector<1x1x384xf32> to vector<1x384xf32>
    %c0_10 = arith.constant 0 : index
    %c0_11 = arith.constant 0 : index
    %15 = vector.load %arg4[%c0_10, %c0_11] : memref<16x384xi8, #tpu.memory_space<vmem>>, vector<16x384xi8>
    %16 = arith.sitofp %15 : vector<16x384xi8> to vector<16x384xf32>
    %17 = vector.broadcast %14 : vector<1x384xf32> to vector<16x384xf32>
    %18 = arith.mulf %17, %16 : vector<16x384xf32>
    %19 = arith.addf %12, %18 : vector<16x384xf32>
    %c3 = arith.constant 3 : index
    %c0_12 = arith.constant 0 : index
    %c0_13 = arith.constant 0 : index
    %20 = vector.load %arg1[%c3, %c0_12, %c0_13] : memref<5x1x384xf32, #tpu.memory_space<vmem>>, vector<1x1x384xf32>
    %21 = vector.shape_cast %20 : vector<1x1x384xf32> to vector<1x384xf32>
    %c0_14 = arith.constant 0 : index
    %c0_15 = arith.constant 0 : index
    %22 = vector.load %arg5[%c0_14, %c0_15] : memref<16x384xi8, #tpu.memory_space<vmem>>, vector<16x384xi8>
    %23 = arith.sitofp %22 : vector<16x384xi8> to vector<16x384xf32>
    %24 = vector.broadcast %21 : vector<1x384xf32> to vector<16x384xf32>
    %25 = arith.mulf %24, %23 : vector<16x384xf32>
    %26 = arith.addf %19, %25 : vector<16x384xf32>
    %c4 = arith.constant 4 : index
    %c0_16 = arith.constant 0 : index
    %c0_17 = arith.constant 0 : index
    %27 = vector.load %arg1[%c4, %c0_16, %c0_17] : memref<5x1x384xf32, #tpu.memory_space<vmem>>, vector<1x1x384xf32>
    %28 = vector.shape_cast %27 : vector<1x1x384xf32> to vector<1x384xf32>
    %c0_18 = arith.constant 0 : index
    %c0_19 = arith.constant 0 : index
    %29 = vector.load %arg6[%c0_18, %c0_19] : memref<16x384xi8, #tpu.memory_space<vmem>>, vector<16x384xi8>
    %30 = arith.sitofp %29 : vector<16x384xi8> to vector<16x384xf32>
    %31 = vector.broadcast %28 : vector<1x384xf32> to vector<16x384xf32>
    %32 = arith.mulf %31, %30 : vector<16x384xf32>
    %33 = arith.addf %26, %32 : vector<16x384xf32>
    %c0_20 = arith.constant 0 : index
    %c0_21 = arith.constant 0 : index
    %34 = vector.load %arg7[%c0_20, %c0_21] : memref<16x384xf32, #tpu.memory_space<vmem>>, vector<16x384xf32>
    tpu.vector_store %arg7[%c0_20, %c0_21], %33 {strides = array<i32>} : memref<16x384xf32, #tpu.memory_space<vmem>>, vector<16x384xf32>,
    return
  }
  func.func @transform_0(%arg0: i32) -> (i32, i32, i32) {
    %c0_i32 = arith.constant 0 : i32
    %c0_i32_0 = arith.constant 0 : i32
    %c0_i32_1 = arith.constant 0 : i32
    return %c0_i32, %c0_i32_0, %arg0 : i32, i32, i32
  }
  func.func @transform_1(%arg0: i32) -> (i32, i32) {
    %c0_i32 = arith.constant 0 : i32
    %c0_i32_0 = arith.constant 0 : i32
    return %c0_i32, %arg0 : i32, i32
  }
  func.func @transform_2(%arg0: i32) -> (i32, i32) {
    %c0_i32 = arith.constant 0 : i32
    %c0_i32_0 = arith.constant 0 : i32
    return %c0_i32, %arg0 : i32, i32
  }
  func.func @transform_3(%arg0: i32) -> (i32, i32) {
    %c0_i32 = arith.constant 0 : i32
    %c0_i32_0 = arith.constant 0 : i32
    return %c0_i32, %arg0 : i32, i32
  }
  func.func @transform_4(%arg0: i32) -> (i32, i32) {
    %c0_i32 = arith.constant 0 : i32
    %c0_i32_0 = arith.constant 0 : i32
    return %c0_i32, %arg0 : i32, i32
  }
  func.func @transform_5(%arg0: i32) -> (i32, i32) {
    %c0_i32 = arith.constant 0 : i32
    %c0_i32_0 = arith.constant 0 : i32
    return %c0_i32, %arg0 : i32, i32
  }
  func.func @transform_6(%arg0: i32) -> (i32, i32) {
    %c0_i32 = arith.constant 0 : i32
    %c0_i32_0 = arith.constant 0 : i32
    return %c0_i32, %arg0 : i32, i32
  }
}

</mosaic_0001>

<llo_original>
// kernel: tpu_custom_call.1
$region0: #{tpu_custom_call.1}
  #allocation0 [shape = 'u32[]', space=smem, size = 0x4, offset = 0x4, fixed_abs, tag = 'smem constant byte address 0x4 - core index']
  #allocation1 [shape = 'u32[144,128]{1,0:T(1,128)}', space=vmem, size = 0x12000, scoped, tag = 'internal scratch']
  %s0 = inlined_call_operand.hbm [shape: f32[5,1,384], index: 0, kind: input, shape index: {}]
  %s1 = inlined_call_operand.hbm [shape: s8[16,384], index: 1, kind: input, shape index: {}]
  %s2 = inlined_call_operand.hbm [shape: s8[16,384], index: 2, kind: input, shape index: {}]
  %s3 = inlined_call_operand.hbm [shape: s8[16,384], index: 3, kind: input, shape index: {}]
  %s4 = inlined_call_operand.vmem [shape: s8[16,384], index: 4, kind: input, shape index: {}]
  %s5 = inlined_call_operand.hbm [shape: s8[16,384], index: 5, kind: input, shape index: {}]
  %s6 = inlined_call_operand.hbm [shape: f32[16,384], index: 6, kind: output, shape index: {}]
  %s7 = sld [smem:[#allocation0]]
  $region54: #{tpu_custom_call.1} parent=0
    _
  %s9 = ssub.s32 1, %s7
  %s10 = scalar_select 0, %s9, %s7
  $region1: #{tpu_custom_call.1} parent=0
    #allocation2 [shape = 'u8[7680]{0}', space=vmem, size = 0x2000, scoped, tag = 'input window, operand 0, single buffered']
    #allocation3 [shape = 's32[1]{0}', space=sflag, size = 0x4, scoped, tag = 'scoped memory for tpu_custom_call.1']
    #allocation4 [shape = 's32[1]{0}', space=sflag, size = 0x4, scoped, tag = 'scoped memory for tpu_custom_call.1']
    #allocation5 [shape = 'u8[6144]{0}', space=vmem, size = 0x1800, scoped, tag = 'input window, operand 1, single buffered']
    #allocation6 [shape = 's32[1]{0}', space=sflag, size = 0x4, scoped, tag = 'scoped memory for tpu_custom_call.1']
    #allocation7 [shape = 'u8[6144]{0}', space=vmem, size = 0x1800, scoped, tag = 'input window, operand 2, single buffered']
    #allocation8 [shape = 'u8[6144]{0}', space=vmem, size = 0x1800, scoped, tag = 'input window, operand 3, single buffered']
    #allocation9 [shape = 's32[1]{0}', space=sflag, size = 0x4, scoped, tag = 'scoped memory for tpu_custom_call.1']
    #allocation10 [shape = 'u8[6144]{0}', space=vmem, size = 0x1800, scoped, tag = 'input window, operand 5, single buffered']
    #allocation11 [shape = 'u8[24576]{0}', space=vmem, size = 0x6000, scoped, tag = 'output window, operand 0, single buffered']
    %11 = vsyncpa [#allocation3], 0
    %12 = vsyncpa [#allocation6], 0
    %13 = vsyncpa [#allocation9], 0
    %14 = vsyncpa [#allocation4], 0
    // Predicated region
    $region2: #{tpu_custom_call.1} parent=1 // pred_check
      _
    $region3: #{tpu_custom_call.1} parent=1 // pred_check_branch
      %16 = sbr.rel (0) target = $region5
    $region4: #{tpu_custom_call.1} parent=1 // pred_region
      %s18 = ssub.s32 240, 240
      %19 = vsyncadd [#allocation3], %s18
      %s20 = sshll.u32 [#allocation2], 4
      %s21 = int_to_ptr.vmem [resolvable:$true] %s20
      %26 = dma.hbm_to_vmem [thread:$0]  %s0, 240, %s21, [#allocation3], 48, 48, 3
    $region5: #{tpu_custom_call.1} parent=1 // pred_fallthru
      _
    // Predicated region
    $region6: #{tpu_custom_call.1} parent=1 // pred_check
      _
    $region7: #{tpu_custom_call.1} parent=1 // pred_check_branch
      %28 = sbr.rel (0) target = $region9
    $region8: #{tpu_custom_call.1} parent=1 // pred_region
      %s30 = ssub.s32 192, 192
      %31 = vsyncadd [#allocation6], %s30
      %s32 = sshll.u32 [#allocation5], 4
      %s33 = int_to_ptr.vmem [resolvable:$true] %s32
      %38 = dma.hbm_to_vmem [thread:$0]  %s1, 192, %s33, [#allocation6], 96, 96, 6
    $region9: #{tpu_custom_call.1} parent=1 // pred_fallthru
      _
    // Predicated region
    $region10: #{tpu_custom_call.1} parent=1 // pred_check
      _
    $region11: #{tpu_custom_call.1} parent=1 // pred_check_branch
      %40 = sbr.rel (0) target = $region13
    $region12: #{tpu_custom_call.1} parent=1 // pred_region
      %s42 = ssub.s32 192, 192
      %43 = vsyncadd [#allocation6], %s42
      %s44 = sshll.u32 [#allocation7], 4
      %s45 = int_to_ptr.vmem [resolvable:$true] %s44
      %50 = dma.hbm_to_vmem [thread:$0]  %s2, 192, %s45, [#allocation6], 96, 96, 6
    $region13: #{tpu_custom_call.1} parent=1 // pred_fallthru
      _
    // Predicated region
    $region14: #{tpu_custom_call.1} parent=1 // pred_check
      _
    $region15: #{tpu_custom_call.1} parent=1 // pred_check_branch
      %52 = sbr.rel (0) target = $region17
    $region16: #{tpu_custom_call.1} parent=1 // pred_region
      %s54 = ssub.s32 192, 192
      %55 = vsyncadd [#allocation9], %s54
      %s56 = sshll.u32 [#allocation8], 4
      %s57 = int_to_ptr.vmem [resolvable:$true] %s56
      %62 = dma.hbm_to_vmem [thread:$0]  %s3, 192, %s57, [#allocation9], 96, 96, 6
    $region17: #{tpu_custom_call.1} parent=1 // pred_fallthru
      _
    // Predicated region
    $region18: #{tpu_custom_call.1} parent=1 // pred_check
      _
    $region19: #{tpu_custom_call.1} parent=1 // pred_check_branch
      %64 = sbr.rel (0) target = $region21
    $region20: #{tpu_custom_call.1} parent=1 // pred_region
      _
    $region21: #{tpu_custom_call.1} parent=1 // pred_fallthru
      _
    // Predicated region
    $region22: #{tpu_custom_call.1} parent=1 // pred_check
      _
    $region23: #{tpu_custom_call.1} parent=1 // pred_check_branch
      %66 = sbr.rel (0) target = $region25
    $region24: #{tpu_custom_call.1} parent=1 // pred_region
      %s68 = ssub.s32 192, 192
      %69 = vsyncadd [#allocation9], %s68
      %s70 = sshll.u32 [#allocation10], 4
      %s71 = int_to_ptr.vmem [resolvable:$true] %s70
      %76 = dma.hbm_to_vmem [thread:$0]  %s5, 192, %s71, [#allocation9], 96, 96, 6
    $region25: #{tpu_custom_call.1} parent=1 // pred_fallthru
      _
    // Predicated region
    $region26: #{tpu_custom_call.1} parent=1 // pred_check
      _
    $region27: #{tpu_custom_call.1} parent=1 // pred_check_branch
      %78 = sbr.rel (0) target = $region29
    $region28: #{tpu_custom_call.1} parent=1 // pred_region
      %79 = dma.done [#allocation3], 240
    $region29: #{tpu_custom_call.1} parent=1 // pred_fallthru
      _
    // Predicated region
    $region30: #{tpu_custom_call.1} parent=1 // pred_check
      _
    $region31: #{tpu_custom_call.1} parent=1 // pred_check_branch
      %81 = sbr.rel (0) target = $region33
    $region32: #{tpu_custom_call.1} parent=1 // pred_region
      %82 = dma.done [#allocation6], 192
    $region33: #{tpu_custom_call.1} parent=1 // pred_fallthru
      _
    // Predicated region
    $region34: #{tpu_custom_call.1} parent=1 // pred_check
      _
    $region35: #{tpu_custom_call.1} parent=1 // pred_check_branch
      %84 = sbr.rel (0) target = $region37
    $region36: #{tpu_custom_call.1} parent=1 // pred_region
      %85 = dma.done [#allocation6], 192
    $region37: #{tpu_custom_call.1} parent=1 // pred_fallthru
      _
    // Predicated region
    $region38: #{tpu_custom_call.1} parent=1 // pred_check
      _
    $region39: #{tpu_custom_call.1} parent=1 // pred_check_branch
      %87 = sbr.rel (0) target = $region41
    $region40: #{tpu_custom_call.1} parent=1 // pred_region
      %88 = dma.done [#allocation9], 192
    $region41: #{tpu_custom_call.1} parent=1 // pred_fallthru
      _
    // Predicated region
    $region42: #{tpu_custom_call.1} parent=1 // pred_check
      _
    $region43: #{tpu_custom_call.1} parent=1 // pred_check_branch
      %90 = sbr.rel (0) target = $region45
    $region44: #{tpu_custom_call.1} parent=1 // pred_region
      %91 = dma.done [#allocation9], 192
    $region45: #{tpu_custom_call.1} parent=1 // pred_fallthru
      _
    %v92 = vld [vmem:[#allocation2] sm:$0x7]
    %v93 = vld [vmem:[#allocation5] sm:$0x3f]
    %v94 = vld [vmem:[#allocation5 + $0x6] sm:$0x3f]
    %v95 = vunpack.c.0.s8 %v93
    %v96 = vunpack.c.1.s8 %v93
    %v97 = vunpack.c.2.s8 %v93
    %v98 = vunpack.c.0.s8 %v94
    %v99 = vunpack.c.1.s8 %v94
    %v100 = vunpack.c.2.s8 %v94
    %v101 = vcvt.s32.f32 %v95
    %v102 = vcvt.s32.f32 %v96
    %v103 = vcvt.s32.f32 %v97
    %v104 = vcvt.s32.f32 %v98
    %v105 = vcvt.s32.f32 %v99
    %v106 = vcvt.s32.f32 %v100
    %v108 = vlaneseq
    %v109 = vshrl.u32 %v108, 7
    %v110 = vsub.s32 0, %v109
    %v111 = vrot.slane %v92, %v110
    %v112 = vlaneseq
    %v113 = vshrl.u32 %v112, 7
    %v114 = vsub.s32 1, %v113
    %v115 = vrot.slane %v92, %v114
    %v116 = vlaneseq
    %v117 = vshrl.u32 %v116, 7
    %v118 = vsub.s32 2, %v117
    %v119 = vrot.slane %v92, %v118
    %v123 = vmul.f32 %v111, %v101
    %v124 = vmul.f32 %v115, %v102
    %v125 = vmul.f32 %v119, %v103
    %v126 = vmul.f32 %v111, %v104
    %v127 = vmul.f32 %v115, %v105
    %v128 = vmul.f32 %v119, %v106
    %s129 = scalar_lea.vmem [#allocation2], 3
    %v130 = vld [vmem:[%s129] sm:$0x7]
    %v131 = vld [vmem:[#allocation7] sm:$0x3f]
    %v132 = vld [vmem:[#allocation7 + $0x6] sm:$0x3f]
    %v133 = vunpack.c.0.s8 %v131
    %v134 = vunpack.c.1.s8 %v131
    %v135 = vunpack.c.2.s8 %v131
    %v136 = vunpack.c.0.s8 %v132
    %v137 = vunpack.c.1.s8 %v132
    %v138 = vunpack.c.2.s8 %v132
    %v139 = vcvt.s32.f32 %v133
    %v140 = vcvt.s32.f32 %v134
    %v141 = vcvt.s32.f32 %v135
    %v142 = vcvt.s32.f32 %v136
    %v143 = vcvt.s32.f32 %v137
    %v144 = vcvt.s32.f32 %v138
    %v146 = vlaneseq
    %v147 = vshrl.u32 %v146, 7
    %v148 = vsub.s32 0, %v147
    %v149 = vrot.slane %v130, %v148
    %v150 = vlaneseq
    %v151 = vshrl.u32 %v150, 7
    %v152 = vsub.s32 1, %v151
    %v153 = vrot.slane %v130, %v152
    %v154 = vlaneseq
    %v155 = vshrl.u32 %v154, 7
    %v156 = vsub.s32 2, %v155
    %v157 = vrot.slane %v130, %v156
    %v161 = vmul.f32 %v149, %v139
    %v162 = vmul.f32 %v153, %v140
    %v163 = vmul.f32 %v157, %v141
    %v164 = vmul.f32 %v149, %v142
    %v165 = vmul.f32 %v153, %v143
    %v166 = vmul.f32 %v157, %v144
    %v167 = vadd.f32 %v123, %v161
    %v168 = vadd.f32 %v124, %v162
    %v169 = vadd.f32 %v125, %v163
    %v170 = vadd.f32 %v126, %v164
    %v171 = vadd.f32 %v127, %v165
    %v172 = vadd.f32 %v128, %v166
    %s173 = scalar_lea.vmem [#allocation2], 6
    %v174 = vld [vmem:[%s173] sm:$0x7]
    %v175 = vld [vmem:[#allocation8] sm:$0x3f]
    %v176 = vld [vmem:[#allocation8 + $0x6] sm:$0x3f]
    %v177 = vunpack.c.0.s8 %v175
    %v178 = vunpack.c.1.s8 %v175
    %v179 = vunpack.c.2.s8 %v175
    %v180 = vunpack.c.0.s8 %v176
    %v181 = vunpack.c.1.s8 %v176
    %v182 = vunpack.c.2.s8 %v176
    %v183 = vcvt.s32.f32 %v177
    %v184 = vcvt.s32.f32 %v178
    %v185 = vcvt.s32.f32 %v179
    %v186 = vcvt.s32.f32 %v180
    %v187 = vcvt.s32.f32 %v181
    %v188 = vcvt.s32.f32 %v182
    %v190 = vlaneseq
    %v191 = vshrl.u32 %v190, 7
    %v192 = vsub.s32 0, %v191
    %v193 = vrot.slane %v174, %v192
    %v194 = vlaneseq
    %v195 = vshrl.u32 %v194, 7
    %v196 = vsub.s32 1, %v195
    %v197 = vrot.slane %v174, %v196
    %v198 = vlaneseq
    %v199 = vshrl.u32 %v198, 7
    %v200 = vsub.s32 2, %v199
    %v201 = vrot.slane %v174, %v200
    %v205 = vmul.f32 %v193, %v183
    %v206 = vmul.f32 %v197, %v184
    %v207 = vmul.f32 %v201, %v185
    %v208 = vmul.f32 %v193, %v186
    %v209 = vmul.f32 %v197, %v187
    %v210 = vmul.f32 %v201, %v188
    %v211 = vadd.f32 %v167, %v205
    %v212 = vadd.f32 %v168, %v206
    %v213 = vadd.f32 %v169, %v207
    %v214 = vadd.f32 %v170, %v208
    %v215 = vadd.f32 %v171, %v209
    %v216 = vadd.f32 %v172, %v210
    %s217 = scalar_lea.vmem [#allocation2], 9
    %v218 = vld [vmem:[%s217] sm:$0x7]
    %v219 = vld [vmem:[%s4] sm:$0x3f]
    %v220 = vld [vmem:[%s4 + $0x6] sm:$0x3f]
    %v221 = vunpack.c.0.s8 %v219
    %v222 = vunpack.c.1.s8 %v219
    %v223 = vunpack.c.2.s8 %v219
    %v224 = vunpack.c.0.s8 %v220
    %v225 = vunpack.c.1.s8 %v220
    %v226 = vunpack.c.2.s8 %v220
    %v227 = vcvt.s32.f32 %v221
    %v228 = vcvt.s32.f32 %v222
    %v229 = vcvt.s32.f32 %v223
    %v230 = vcvt.s32.f32 %v224
    %v231 = vcvt.s32.f32 %v225
    %v232 = vcvt.s32.f32 %v226
    %v234 = vlaneseq
    %v235 = vshrl.u32 %v234, 7
    %v236 = vsub.s32 0, %v235
    %v237 = vrot.slane %v218, %v236
    %v238 = vlaneseq
    %v239 = vshrl.u32 %v238, 7
    %v240 = vsub.s32 1, %v239
    %v241 = vrot.slane %v218, %v240
    %v242 = vlaneseq
    %v243 = vshrl.u32 %v242, 7
    %v244 = vsub.s32 2, %v243
    %v245 = vrot.slane %v218, %v244
    %v249 = vmul.f32 %v237, %v227
    %v250 = vmul.f32 %v241, %v228
    %v251 = vmul.f32 %v245, %v229
    %v252 = vmul.f32 %v237, %v230
    %v253 = vmul.f32 %v241, %v231
    %v254 = vmul.f32 %v245, %v232
    %v255 = vadd.f32 %v211, %v249
    %v256 = vadd.f32 %v212, %v250
    %v257 = vadd.f32 %v213, %v251
    %v258 = vadd.f32 %v214, %v252
    %v259 = vadd.f32 %v215, %v253
    %v260 = vadd.f32 %v216, %v254
    %s261 = scalar_lea.vmem [#allocation2], 12
    %v262 = vld [vmem:[%s261] sm:$0x7]
    %v263 = vld [vmem:[#allocation10] sm:$0x3f]
    %v264 = vld [vmem:[#allocation10 + $0x6] sm:$0x3f]
    %v265 = vunpack.c.0.s8 %v263
    %v266 = vunpack.c.1.s8 %v263
    %v267 = vunpack.c.2.s8 %v263
    %v268 = vunpack.c.0.s8 %v264
    %v269 = vunpack.c.1.s8 %v264
    %v270 = vunpack.c.2.s8 %v264
    %v271 = vcvt.s32.f32 %v265
    %v272 = vcvt.s32.f32 %v266
    %v273 = vcvt.s32.f32 %v267
    %v274 = vcvt.s32.f32 %v268
    %v275 = vcvt.s32.f32 %v269
    %v276 = vcvt.s32.f32 %v270
    %v278 = vlaneseq
    %v279 = vshrl.u32 %v278, 7
    %v280 = vsub.s32 0, %v279
    %v281 = vrot.slane %v262, %v280
    %v282 = vlaneseq
    %v283 = vshrl.u32 %v282, 7
    %v284 = vsub.s32 1, %v283
    %v285 = vrot.slane %v262, %v284
    %v286 = vlaneseq
    %v287 = vshrl.u32 %v286, 7
    %v288 = vsub.s32 2, %v287
    %v289 = vrot.slane %v262, %v288
    %v293 = vmul.f32 %v281, %v271
    %v294 = vmul.f32 %v285, %v272
    %v295 = vmul.f32 %v289, %v273
    %v296 = vmul.f32 %v281, %v274
    %v297 = vmul.f32 %v285, %v275
    %v298 = vmul.f32 %v289, %v276
    %v299 = vadd.f32 %v255, %v293
    %v300 = vadd.f32 %v256, %v294
    %v301 = vadd.f32 %v257, %v295
    %v302 = vadd.f32 %v258, %v296
    %v303 = vadd.f32 %v259, %v297
    %v304 = vadd.f32 %v260, %v298
    %305 = vst [vmem:[#allocation11] sm:$0xff] %v299
    %306 = vst [vmem:[#allocation11 + $0x8] sm:$0xff] %v300
    %307 = vst [vmem:[#allocation11 + $0x10] sm:$0xff] %v301
    %308 = vst [vmem:[#allocation11 + $0x18] sm:$0xff] %v302
    %309 = vst [vmem:[#allocation11 + $0x20] sm:$0xff] %v303
    %310 = vst [vmem:[#allocation11 + $0x28] sm:$0xff] %v304
    // Predicated region
    $region46: #{tpu_custom_call.1} parent=1 // pred_check
      _
    $region47: #{tpu_custom_call.1} parent=1 // pred_check_branch
      %312 = sbr.rel (0) target = $region49
    $region48: #{tpu_custom_call.1} parent=1 // pred_region
      %s314 = ssub.s32 768, 768
      %315 = vsyncadd [#allocation4], %s314
      %s316 = sshll.u32 [#allocation11], 4
      %s317 = int_to_ptr.vmem [resolvable:$true] %s316
      %322 = dma.vmem_to_hbm [thread:$0]  %s317, 768, %s6, [#allocation4], 384, 384, 24
    $region49: #{tpu_custom_call.1} parent=1 // pred_fallthru
      _
    // Predicated region
    $region50: #{tpu_custom_call.1} parent=1 // pred_check
      _
    $region51: #{tpu_custom_call.1} parent=1 // pred_check_branch
      %324 = sbr.rel (0) target = $region53
    $region52: #{tpu_custom_call.1} parent=1 // pred_region
      %325 = dma.done [#allocation4], 768
    $region53: #{tpu_custom_call.1} parent=1 // pred_fallthru
      _
    %326 = vsyncpa [#allocation3], 1
    %327 = vsyncpa [#allocation6], 1
    %328 = vsyncpa [#allocation9], 1
    %329 = vsyncpa [#allocation4], 1

</llo_original>
